<compile_context>
chip_gen: v6e
topology: v6e:2x2x1
jax: 0.10.0
libtpu: 0.0.40
codegen_flags: <defaults>
</compile_context>

<pallas_src>
import math

import jax
import jax.numpy as jnp
from jax.experimental import pallas as pl
from jax.experimental.pallas import tpu as pltpu

LANE = 128  # TPU lane width


def _snr_embed_kernel(snr_ref, table_ref, w1_ref, b1_ref, w2_ref, b2_ref, o_ref):
    B = snr_ref.shape[0]
    T = table_ref.shape[0]

    # Fused embedding lookup: one_hot(SNR) @ table -> (B, d_model_padded).
    snr = snr_ref[...]                                      # (B, 1) int32
    iota = jax.lax.broadcasted_iota(jnp.int32, (B, T), 1)   # (B, T)
    one_hot = (snr == iota).astype(jnp.float32)             # (B, T)
    x = jnp.dot(one_hot, table_ref[...], preferred_element_type=jnp.float32)

    # Linear 1 + Swish (sigmoid -> EUP logistic path).
    h = jnp.dot(x, w1_ref[...], preferred_element_type=jnp.float32) + b1_ref[...]
    h = h * jax.nn.sigmoid(h)

    # Linear 2.
    out = jnp.dot(h, w2_ref[...], preferred_element_type=jnp.float32) + b2_ref[...]
    o_ref[...] = out.astype(o_ref.dtype)


def _pad2d(x, rows, cols):
    r, c = x.shape
    return jnp.pad(x, ((0, rows - r), (0, cols - c)))


def _round_up(n, m):
    return ((n + m - 1) // m) * m


def prepare_params(table, w1, b1, w2, b2):
    """Zero-pads feature axes to 128 lanes (done once, outside the hot path)."""
    T, d_model = table.shape
    dim = w1.shape[1]
    d_pad = max(LANE, _round_up(d_model, LANE))
    p_pad = max(LANE, _round_up(dim, LANE))
    table_p = _pad2d(table, T, d_pad)
    w1_p = _pad2d(w1, d_pad, p_pad)
    b1_p = _pad2d(b1, 1, p_pad)
    w2_p = _pad2d(w2, p_pad, p_pad)
    b2_p = _pad2d(b2, 1, p_pad)
    return table_p, w1_p, b1_p, w2_p, b2_p


def snr_embedding_forward(SNR, table_p, w1_p, b1_p, w2_p, b2_p, dim):
    """Single fused Pallas kernel: gather -> Linear -> Swish -> Linear."""
    B = SNR.shape[0]
    P = w2_p.shape[1]  # padded feature width (multiple of 128)
    snr2d = SNR.astype(jnp.int32).reshape(B, 1)

    out_pad = pl.pallas_call(
        _snr_embed_kernel,
        out_shape=jax.ShapeDtypeStruct((B, P), jnp.float32),
        in_specs=[
            pl.BlockSpec(memory_space=pltpu.MemorySpace.VMEM) for _ in range(6)
        ],
        out_specs=pl.BlockSpec(memory_space=pltpu.MemorySpace.VMEM),
    )(snr2d, table_p, w1_p, b1_p, w2_p, b2_p)

    # Lane-dense (B, 128) slab written by the kernel; trim to model dim here.
    return out_pad[:, :dim]


def make_sinusoidal_table(T, d_model):
    """Reproduces the PyTorch __init__ embedding table construction."""
    assert d_model % 2 == 0
    emb = jnp.arange(0, d_model, step=2, dtype=jnp.float32) / d_model * math.log(10000.0)
    emb = jnp.exp(-emb)                                     # (d_model//2,)
    pos = jnp.arange(T, dtype=jnp.float32)                  # (T,)
    emb = pos[:, None] * emb[None, :]                       # (T, d_model//2)
    emb = jnp.stack([jnp.sin(emb), jnp.cos(emb)], axis=-1)  # (T, d_model//2, 2)
    emb = emb.reshape(T, d_model)                           # (T, d_model)
    return emb


def xavier_uniform(key, fan_in, fan_out):
    # Matches torch.nn.init.xavier_uniform_ (gain=1); symmetric in fan_in/out.
    a = math.sqrt(6.0 / (fan_in + fan_out))
    return jax.random.uniform(key, (fan_in, fan_out), jnp.float32, minval=-a, maxval=a)


if __name__ == "__main__":
    T = 16        # number of timesteps / SNR levels
    d_model = 32  # embedding width (must be even)
    dim = 32      # MLP width
    B = 8         # batch of SNR indices

    key = jax.random.PRNGKey(0)
    k1, k2, k_idx = jax.random.split(key, 3)

    table = make_sinusoidal_table(T, d_model)
    # torch.nn.Linear stores weight as (out, in); the matmul is x @ W.T.
    # We store already-transposed (in, out) matrices; xavier_uniform is
    # symmetric in fan_in/fan_out so the distribution matches.
    w1 = xavier_uniform(k1, d_model, dim)
    b1 = jnp.zeros((1, dim), jnp.float32)
    w2 = xavier_uniform(k2, dim, dim)
    b2 = jnp.zeros((1, dim), jnp.float32)

    SNR = jax.random.randint(k_idx, (B,), 0, T, dtype=jnp.int32)

    # One-time lane padding of the frozen parameters.
    table_p, w1_p, b1_p, w2_p, b2_p = prepare_params(table, w1, b1, w2, b2)

    out = snr_embedding_forward(SNR, table_p, w1_p, b1_p, w2_p, b2_p, dim)
    out = jax.block_until_ready(out)

    # Reference check in plain JAX (unpadded).
    x_ref = jnp.take(table, SNR, axis=0)
    h_ref = x_ref @ w1 + b1
    h_ref = h_ref * jax.nn.sigmoid(h_ref)
    ref = h_ref @ w2 + b2
    assert out.shape == (B, dim)
    assert jnp.allclose(out, ref, atol=1e-5, rtol=1e-5)

    print("KERNEL_OK")
</pallas_src>

<mosaic_0001>
module attributes {stable_mosaic.version = 11 : i64} {
  func.func @_snr_embed_kernel(%arg0: memref<8x1xi32, #tpu.memory_space<vmem>>, %arg1: memref<16x128xf32, #tpu.memory_space<vmem>>, %arg2: memref<128x128xf32, #tpu.memory_space<vmem>>, %arg3: memref<1x128xf32, #tpu.memory_space<vmem>>, %arg4: memref<128x128xf32, #tpu.memory_space<vmem>>, %arg5: memref<1x128xf32, #tpu.memory_space<vmem>>, %arg6: memref<8x128xf32, #tpu.memory_space<vmem>>) attributes {dimension_semantics = [], scalar_prefetch = 0 : i64, scratch_operands = 0 : i64, tpu.core_type = #tpu.core_type<tc>} {
    %c0 = arith.constant 0 : index
    %c0_0 = arith.constant 0 : index
    %0 = vector.load %arg0[%c0, %c0_0] : memref<8x1xi32, #tpu.memory_space<vmem>>, vector<8x1xi32>
    %1 = tpu.iota {dimensions = array<i32: 1>} : vector<8x16xi32>
    %2 = vector.broadcast %0 : vector<8x1xi32> to vector<8x16xi32>
    %3 = arith.cmpi eq, %2, %1 : vector<8x16xi32>
    %4 = arith.extui %3 : vector<8x16xi1> to vector<8x16xi32>
    %5 = arith.sitofp %4 : vector<8x16xi32> to vector<8x16xf32>
    %c0_1 = arith.constant 0 : index
    %c0_2 = arith.constant 0 : index
    %6 = vector.load %arg1[%c0_1, %c0_2] : memref<16x128xf32, #tpu.memory_space<vmem>>, vector<16x128xf32>
    %cst = arith.constant dense<0.000000e+00> : vector<8x128xf32>
    %7 = tpu.matmul %5, %6, %cst {dimension_numbers = #tpu.dot_dimension_numbers<[1], [0], [0], [1], [0, 0, 1, 1], [], []>} : vector<8x16xf32>, vector<16x128xf32>, vector<8x128xf32> -> vector<8x128xf32>
    %c0_3 = arith.constant 0 : index
    %c0_4 = arith.constant 0 : index
    %8 = vector.load %arg2[%c0_3, %c0_4] : memref<128x128xf32, #tpu.memory_space<vmem>>, vector<128x128xf32>
    %cst_5 = arith.constant dense<0.000000e+00> : vector<8x128xf32>
    %9 = tpu.matmul %7, %8, %cst_5 {dimension_numbers = #tpu.dot_dimension_numbers<[1], [0], [0], [1], [0, 0, 1, 1], [], []>} : vector<8x128xf32>, vector<128x128xf32>, vector<8x128xf32> -> vector<8x128xf32>
    %c0_6 = arith.constant 0 : index
    %c0_7 = arith.constant 0 : index
    %10 = vector.load %arg3[%c0_6, %c0_7] : memref<1x128xf32, #tpu.memory_space<vmem>>, vector<1x128xf32>
    %11 = vector.broadcast %10 : vector<1x128xf32> to vector<8x128xf32>
    %12 = arith.addf %9, %11 : vector<8x128xf32>
    %13 = arith.negf %12 : vector<8x128xf32>
    %14 = math.exp %13 : vector<8x128xf32>
    %cst_8 = arith.constant 1.000000e+00 : f32
    %15 = vector.broadcast %cst_8 : f32 to vector<8x128xf32>
    %16 = arith.addf %15, %14 : vector<8x128xf32>
    %17 = arith.divf %15, %16 : vector<8x128xf32>
    %18 = arith.mulf %12, %17 : vector<8x128xf32>
    %c0_9 = arith.constant 0 : index
    %c0_10 = arith.constant 0 : index
    %19 = vector.load %arg4[%c0_9, %c0_10] : memref<128x128xf32, #tpu.memory_space<vmem>>, vector<128x128xf32>
    %cst_11 = arith.constant dense<0.000000e+00> : vector<8x128xf32>
    %20 = tpu.matmul %18, %19, %cst_11 {dimension_numbers = #tpu.dot_dimension_numbers<[1], [0], [0], [1], [0, 0, 1, 1], [], []>} : vector<8x128xf32>, vector<128x128xf32>, vector<8x128xf32> -> vector<8x128xf32>
    %c0_12 = arith.constant 0 : index
    %c0_13 = arith.constant 0 : index
    %21 = vector.load %arg5[%c0_12, %c0_13] : memref<1x128xf32, #tpu.memory_space<vmem>>, vector<1x128xf32>
    %22 = vector.broadcast %21 : vector<1x128xf32> to vector<8x128xf32>
    %23 = arith.addf %20, %22 : vector<8x128xf32>
    %c0_14 = arith.constant 0 : index
    %c0_15 = arith.constant 0 : index
    %24 = vector.load %arg6[%c0_14, %c0_15] : memref<8x128xf32, #tpu.memory_space<vmem>>, vector<8x128xf32>
    tpu.vector_store %arg6[%c0_14, %c0_15], %23 {strides = array<i32>} : memref<8x128xf32, #tpu.memory_space<vmem>>, vector<8x128xf32>,
    return
  }
}

</mosaic_0001>

<llo_original>
// kernel: tpu_custom_call.1
$region0: #{tpu_custom_call.1}
  #allocation0 [shape = 'u32[]', space=smem, size = 0x4, offset = 0x4, fixed_abs, tag = 'smem constant byte address 0x4 - core index']
  #allocation1 [shape = 'u32[144,128]{1,0:T(1,128)}', space=vmem, size = 0x12000, scoped, tag = 'internal scratch']
  %s0 = inlined_call_operand.vmem [shape: s32[8,1], index: 0, kind: input, shape index: {}]
  %s1 = inlined_call_operand.hbm [shape: f32[16,128], index: 1, kind: input, shape index: {}]
  %s2 = inlined_call_operand.hbm [shape: f32[128,128], index: 2, kind: input, shape index: {}]
  %s3 = inlined_call_operand.vmem [shape: f32[1,128], index: 3, kind: input, shape index: {}]
  %s4 = inlined_call_operand.hbm [shape: f32[128,128], index: 4, kind: input, shape index: {}]
  %s5 = inlined_call_operand.vmem [shape: f32[1,128], index: 5, kind: input, shape index: {}]
  %s6 = inlined_call_operand.hbm [shape: f32[8,128], index: 6, kind: output, shape index: {}]
  %s7 = sld [smem:[#allocation0]]
  $region46: #{tpu_custom_call.1} parent=0
    _
  %s9 = ssub.s32 1, %s7
  %s10 = scalar_select 0, %s9, %s7
  $region1: #{tpu_custom_call.1} parent=0
    #allocation2 [shape = 'u8[8192]{0}', space=vmem, size = 0x2000, scoped, tag = 'input window, operand 1, single buffered']
    #allocation3 [shape = 's32[1]{0}', space=sflag, size = 0x4, scoped, tag = 'scoped memory for tpu_custom_call.1']
    #allocation4 [shape = 's32[1]{0}', space=sflag, size = 0x4, scoped, tag = 'scoped memory for tpu_custom_call.1']
    #allocation5 [shape = 'u8[65536]{0}', space=vmem, size = 0x10000, scoped, tag = 'input window, operand 2, single buffered']
    #allocation6 [shape = 's32[1]{0}', space=sflag, size = 0x4, scoped, tag = 'scoped memory for tpu_custom_call.1']
    #allocation7 [shape = 'u8[65536]{0}', space=vmem, size = 0x10000, scoped, tag = 'input window, operand 4, single buffered']
    #allocation8 [shape = 'u8[4096]{0}', space=vmem, size = 0x1000, scoped, tag = 'output window, operand 0, single buffered']
    %11 = vsyncpa [#allocation3], 0
    %12 = vsyncpa [#allocation6], 0
    %13 = vsyncpa [#allocation4], 0
    // Predicated region
    $region2: #{tpu_custom_call.1} parent=1 // pred_check
      _
    $region3: #{tpu_custom_call.1} parent=1 // pred_check_branch
      %15 = sbr.rel (0) target = $region5
    $region4: #{tpu_custom_call.1} parent=1 // pred_region
      _
    $region5: #{tpu_custom_call.1} parent=1 // pred_fallthru
      _
    // Predicated region
    $region6: #{tpu_custom_call.1} parent=1 // pred_check
      _
    $region7: #{tpu_custom_call.1} parent=1 // pred_check_branch
      %17 = sbr.rel (0) target = $region9
    $region8: #{tpu_custom_call.1} parent=1 // pred_region
      %s19 = ssub.s32 256, 256
      %20 = vsyncadd [#allocation3], %s19
      %s21 = sshll.u32 [#allocation2], 4
      %s22 = int_to_ptr.vmem [resolvable:$true] %s21
      %27 = dma.hbm_to_vmem [thread:$0]  %s1, 256, %s22, [#allocation3], 128, 128, 8
    $region9: #{tpu_custom_call.1} parent=1 // pred_fallthru
      _
    // Predicated region
    $region10: #{tpu_custom_call.1} parent=1 // pred_check
      _
    $region11: #{tpu_custom_call.1} parent=1 // pred_check_branch
      %29 = sbr.rel (0) target = $region13
    $region12: #{tpu_custom_call.1} parent=1 // pred_region
      %s31 = ssub.s32 2048, 2048
      %32 = vsyncadd [#allocation6], %s31
      %s33 = sshll.u32 [#allocation5], 4
      %s34 = int_to_ptr.vmem [resolvable:$true] %s33
      %39 = dma.hbm_to_vmem [thread:$0]  %s2, 2048, %s34, [#allocation6], 128, 128, 8
    $region13: #{tpu_custom_call.1} parent=1 // pred_fallthru
      _
    // Predicated region
    $region14: #{tpu_custom_call.1} parent=1 // pred_check
      _
    $region15: #{tpu_custom_call.1} parent=1 // pred_check_branch
      %41 = sbr.rel (0) target = $region17
    $region16: #{tpu_custom_call.1} parent=1 // pred_region
      _
    $region17: #{tpu_custom_call.1} parent=1 // pred_fallthru
      _
    // Predicated region
    $region18: #{tpu_custom_call.1} parent=1 // pred_check
      _
    $region19: #{tpu_custom_call.1} parent=1 // pred_check_branch
      %43 = sbr.rel (0) target = $region21
    $region20: #{tpu_custom_call.1} parent=1 // pred_region
      %s45 = ssub.s32 2048, 2048
      %46 = vsyncadd [#allocation6], %s45
      %s47 = sshll.u32 [#allocation7], 4
      %s48 = int_to_ptr.vmem [resolvable:$true] %s47
      %53 = dma.hbm_to_vmem [thread:$0]  %s4, 2048, %s48, [#allocation6], 128, 128, 8
    $region21: #{tpu_custom_call.1} parent=1 // pred_fallthru
      _
    // Predicated region
    $region22: #{tpu_custom_call.1} parent=1 // pred_check
      _
    $region23: #{tpu_custom_call.1} parent=1 // pred_check_branch
      %55 = sbr.rel (0) target = $region25
    $region24: #{tpu_custom_call.1} parent=1 // pred_region
      _
    $region25: #{tpu_custom_call.1} parent=1 // pred_fallthru
      _
    // Predicated region
    $region26: #{tpu_custom_call.1} parent=1 // pred_check
      _
    $region27: #{tpu_custom_call.1} parent=1 // pred_check_branch
      %57 = sbr.rel (0) target = $region29
    $region28: #{tpu_custom_call.1} parent=1 // pred_region
      %58 = dma.done [#allocation3], 256
    $region29: #{tpu_custom_call.1} parent=1 // pred_fallthru
      _
    // Predicated region
    $region30: #{tpu_custom_call.1} parent=1 // pred_check
      _
    $region31: #{tpu_custom_call.1} parent=1 // pred_check_branch
      %60 = sbr.rel (0) target = $region33
    $region32: #{tpu_custom_call.1} parent=1 // pred_region
      %61 = dma.done [#allocation6], 2048
    $region33: #{tpu_custom_call.1} parent=1 // pred_fallthru
      _
    // Predicated region
    $region34: #{tpu_custom_call.1} parent=1 // pred_check
      _
    $region35: #{tpu_custom_call.1} parent=1 // pred_check_branch
      %63 = sbr.rel (0) target = $region37
    $region36: #{tpu_custom_call.1} parent=1 // pred_region
      %64 = dma.done [#allocation6], 2048
    $region37: #{tpu_custom_call.1} parent=1 // pred_fallthru
      _
    %v65 = vld [vmem:[%s0] sm:$0xff]
    %v66 = vlaneseq
    %v67 = vand.u32 %v66, 127
    %68 = vset.pattern.permute.xlu0 0
    %69 = vperm.xlu0 %68, %v65
    %v70 = vpop.permute.xlu0 %69
    %vm71 = vcmp.eq.s32.totalorder %v70, %v67
    %v72 = vsel %vm71, 1, 0
    %v73 = vcvt.s32.f32 %v72
    %v74 = vld [vmem:[#allocation2] sm:$0xff]
    %v75 = vld [vmem:[#allocation2 + $0x8] sm:$0xff]
    %vm76 = vcmask 130048
    %v78 = vsel %vm76, %v73, 0
    %80 = vmatprep.subr.mxu0 0.0
    %81 = vmatpush1.msra.mxu0 0.0
    %82 = vmatprep.subr.mxu0 0.0
    %83 = vmatpush1.msra.mxu0 0.0
    %84 = vmatprep.subr.mxu0 0.0
    %85 = vmatpush1.msra.mxu0 0.0
    %86 = vmatprep.subr.mxu0 0.0
    %87 = vmatpush1.msra.mxu0 0.0
    %88 = vmatprep.subr.mxu0 0.0
    %89 = vmatpush1.msra.mxu0 0.0
    %90 = vmatprep.subr.mxu0 0.0
    %91 = vmatpush1.msra.mxu0 0.0
    %92 = vmatprep.subr.mxu0 0.0
    %93 = vmatpush1.msra.mxu0 0.0
    %94 = vmatprep.subr.mxu0 0.0
    %95 = vmatpush1.msra.mxu0 0.0
    %96 = vmatprep.subr.mxu0 0.0
    %97 = vmatpush1.msra.mxu0 0.0
    %98 = vmatprep.subr.mxu0 0.0
    %99 = vmatpush1.msra.mxu0 0.0
    %100 = vmatprep.subr.mxu0 0.0
    %101 = vmatpush1.msra.mxu0 0.0
    %102 = vmatprep.subr.mxu0 0.0
    %103 = vmatpush1.msra.mxu0 0.0
    %104 = vmatprep.subr.mxu0 0.0
    %105 = vmatpush1.msra.mxu0 0.0
    %106 = vmatprep.subr.mxu0 0.0
    %107 = vmatpush1.msra.mxu0 0.0
    %108 = vmatprep.subr.mxu0 0.0
    %109 = vmatpush1.msra.mxu0 %v75
    %110 = vmatprep.subr.mxu0 0.0
    %111 = vmatpush1.msra.mxu0 %v74
    %112 = vmatprep.subr.mxu0 0.0
    %113 = vmatpush2.msra.mxu0 0.0
    %114 = vmatprep.subr.mxu0 0.0
    %115 = vmatpush2.msra.mxu0 0.0
    %116 = vmatprep.subr.mxu0 0.0
    %117 = vmatpush2.msra.mxu0 0.0
    %118 = vmatprep.subr.mxu0 0.0
    %119 = vmatpush2.msra.mxu0 0.0
    %120 = vmatprep.subr.mxu0 0.0
    %121 = vmatpush2.msra.mxu0 0.0
    %122 = vmatprep.subr.mxu0 0.0
    %123 = vmatpush2.msra.mxu0 0.0
    %124 = vmatprep.subr.mxu0 0.0
    %125 = vmatpush2.msra.mxu0 0.0
    %126 = vmatprep.subr.mxu0 0.0
    %127 = vmatpush2.msra.mxu0 0.0
    %128 = vmatprep.subr.mxu0 0.0
    %129 = vmatpush2.msra.mxu0 0.0
    %130 = vmatprep.subr.mxu0 0.0
    %131 = vmatpush2.msra.mxu0 0.0
    %132 = vmatprep.subr.mxu0 0.0
    %133 = vmatpush2.msra.mxu0 0.0
    %134 = vmatprep.subr.mxu0 0.0
    %135 = vmatpush2.msra.mxu0 0.0
    %136 = vmatprep.subr.mxu0 0.0
    %137 = vmatpush2.msra.mxu0 0.0
    %138 = vmatprep.subr.mxu0 0.0
    %139 = vmatpush2.msra.mxu0 0.0
    %140 = vmatprep.subr.mxu0 0.0
    %141 = vmatpush2.msra.mxu0 0.0
    %142 = vmatprep.subr.mxu0 0.0
    %143 = vmatpush2.msra.mxu0 0.0
    %144 = vmatprep.mubr.f32.mxu0 0.0
    %145 = vmatmul.mubr.f32.gmra.mxu0 %v78
    %v146 = vpop.f32.mrf.mxu0
    %v147 = vadd.f32 0.0, %v146
    %v148 = vpop.f32.mrf.mxu0
    %149 = vdwg.mxu0
    %v150 = vld [vmem:[#allocation5] sm:$0xff]
    %v151 = vld [vmem:[#allocation5 + $0x8] sm:$0xff]
    %v152 = vld [vmem:[#allocation5 + $0x10] sm:$0xff]
    %v153 = vld [vmem:[#allocation5 + $0x18] sm:$0xff]
    %v154 = vld [vmem:[#allocation5 + $0x20] sm:$0xff]
    %v155 = vld [vmem:[#allocation5 + $0x28] sm:$0xff]
    %v156 = vld [vmem:[#allocation5 + $0x30] sm:$0xff]
    %v157 = vld [vmem:[#allocation5 + $0x38] sm:$0xff]
    %v158 = vld [vmem:[#allocation5 + $0x40] sm:$0xff]
    %v159 = vld [vmem:[#allocation5 + $0x48] sm:$0xff]
    %v160 = vld [vmem:[#allocation5 + $0x50] sm:$0xff]
    %v161 = vld [vmem:[#allocation5 + $0x58] sm:$0xff]
    %v162 = vld [vmem:[#allocation5 + $0x60] sm:$0xff]
    %v163 = vld [vmem:[#allocation5 + $0x68] sm:$0xff]
    %v164 = vld [vmem:[#allocation5 + $0x70] sm:$0xff]
    %v165 = vld [vmem:[#allocation5 + $0x78] sm:$0xff]
    %v166 = vld [vmem:[%s3] sm:$0x1]
    %v168 = vlaneseq
    %v169 = vshrl.u32 %v168, 7
    %v170 = vsub.s32 0, %v169
    %v171 = vrot.slane %v166, %v170
    %173 = vmatprep.subr.mxu0 0.0
    %174 = vmatpush1.msra.mxu0 %v165
    %175 = vmatprep.subr.mxu0 0.0
    %176 = vmatpush1.msra.mxu0 %v164
    %177 = vmatprep.subr.mxu0 0.0
    %178 = vmatpush1.msra.mxu0 %v163
    %179 = vmatprep.subr.mxu0 0.0
    %180 = vmatpush1.msra.mxu0 %v162
    %181 = vmatprep.subr.mxu0 0.0
    %182 = vmatpush1.msra.mxu0 %v161
    %183 = vmatprep.subr.mxu0 0.0
    %184 = vmatpush1.msra.mxu0 %v160
    %185 = vmatprep.subr.mxu0 0.0
    %186 = vmatpush1.msra.mxu0 %v159
    %187 = vmatprep.subr.mxu0 0.0
    %188 = vmatpush1.msra.mxu0 %v158
    %189 = vmatprep.subr.mxu0 0.0
    %190 = vmatpush1.msra.mxu0 %v157
    %191 = vmatprep.subr.mxu0 0.0
    %192 = vmatpush1.msra.mxu0 %v156
    %193 = vmatprep.subr.mxu0 0.0
    %194 = vmatpush1.msra.mxu0 %v155
    %195 = vmatprep.subr.mxu0 0.0
    %196 = vmatpush1.msra.mxu0 %v154
    %197 = vmatprep.subr.mxu0 0.0
    %198 = vmatpush1.msra.mxu0 %v153
    %199 = vmatprep.subr.mxu0 0.0
    %200 = vmatpush1.msra.mxu0 %v152
    %201 = vmatprep.subr.mxu0 0.0
    %202 = vmatpush1.msra.mxu0 %v151
    %203 = vmatprep.subr.mxu0 0.0
    %204 = vmatpush1.msra.mxu0 %v150
    %205 = vmatprep.subr.mxu0 0.0
    %206 = vmatpush2.msra.mxu0 0.0
    %207 = vmatprep.subr.mxu0 0.0
    %208 = vmatpush2.msra.mxu0 0.0
    %209 = vmatprep.subr.mxu0 0.0
    %210 = vmatpush2.msra.mxu0 0.0
    %211 = vmatprep.subr.mxu0 0.0
    %212 = vmatpush2.msra.mxu0 0.0
    %213 = vmatprep.subr.mxu0 0.0
    %214 = vmatpush2.msra.mxu0 0.0
    %215 = vmatprep.subr.mxu0 0.0
    %216 = vmatpush2.msra.mxu0 0.0
    %217 = vmatprep.subr.mxu0 0.0
    %218 = vmatpush2.msra.mxu0 0.0
    %219 = vmatprep.subr.mxu0 0.0
    %220 = vmatpush2.msra.mxu0 0.0
    %221 = vmatprep.subr.mxu0 0.0
    %222 = vmatpush2.msra.mxu0 0.0
    %223 = vmatprep.subr.mxu0 0.0
    %224 = vmatpush2.msra.mxu0 0.0
    %225 = vmatprep.subr.mxu0 0.0
    %226 = vmatpush2.msra.mxu0 0.0
    %227 = vmatprep.subr.mxu0 0.0
    %228 = vmatpush2.msra.mxu0 0.0
    %229 = vmatprep.subr.mxu0 0.0
    %230 = vmatpush2.msra.mxu0 0.0
    %231 = vmatprep.subr.mxu0 0.0
    %232 = vmatpush2.msra.mxu0 0.0
    %233 = vmatprep.subr.mxu0 0.0
    %234 = vmatpush2.msra.mxu0 0.0
    %235 = vmatprep.subr.mxu0 0.0
    %236 = vmatpush2.msra.mxu0 0.0
    %237 = vmatprep.mubr.f32.mxu0 0.0
    %238 = vmatmul.mubr.f32.gmra.mxu0 %v147
    %v239 = vpop.f32.mrf.mxu0
    %v240 = vadd.f32 %v171, %v239
    %v241 = vpop.f32.mrf.mxu0
    %242 = vdwg.mxu0
    %v243 = vxor.u32 %v240, 2147483648
    %v244 = vmul.f32 %v243, 1.442695
    %v245 = vpow.pop %v244
    %v246 = vadd.f32 %v245, 1.0
    %v247 = vrcp.pop %v246
    %v248 = vmul.f32 1.0, %v247
    %v249 = vmul.f32 %v240, %v248
    %v250 = vld [vmem:[#allocation7] sm:$0xff]
    %v251 = vld [vmem:[#allocation7 + $0x8] sm:$0xff]
    %v252 = vld [vmem:[#allocation7 + $0x10] sm:$0xff]
    %v253 = vld [vmem:[#allocation7 + $0x18] sm:$0xff]
    %v254 = vld [vmem:[#allocation7 + $0x20] sm:$0xff]
    %v255 = vld [vmem:[#allocation7 + $0x28] sm:$0xff]
    %v256 = vld [vmem:[#allocation7 + $0x30] sm:$0xff]
    %v257 = vld [vmem:[#allocation7 + $0x38] sm:$0xff]
    %v258 = vld [vmem:[#allocation7 + $0x40] sm:$0xff]
    %v259 = vld [vmem:[#allocation7 + $0x48] sm:$0xff]
    %v260 = vld [vmem:[#allocation7 + $0x50] sm:$0xff]
    %v261 = vld [vmem:[#allocation7 + $0x58] sm:$0xff]
    %v262 = vld [vmem:[#allocation7 + $0x60] sm:$0xff]
    %v263 = vld [vmem:[#allocation7 + $0x68] sm:$0xff]
    %v264 = vld [vmem:[#allocation7 + $0x70] sm:$0xff]
    %v265 = vld [vmem:[#allocation7 + $0x78] sm:$0xff]
    %v266 = vld [vmem:[%s5] sm:$0x1]
    %v268 = vlaneseq
    %v269 = vshrl.u32 %v268, 7
    %v270 = vsub.s32 0, %v269
    %v271 = vrot.slane %v266, %v270
    %273 = vmatprep.subr.mxu0 0.0
    %274 = vmatpush1.msra.mxu0 %v265
    %275 = vmatprep.subr.mxu0 0.0
    %276 = vmatpush1.msra.mxu0 %v264
    %277 = vmatprep.subr.mxu0 0.0
    %278 = vmatpush1.msra.mxu0 %v263
    %279 = vmatprep.subr.mxu0 0.0
    %280 = vmatpush1.msra.mxu0 %v262
    %281 = vmatprep.subr.mxu0 0.0
    %282 = vmatpush1.msra.mxu0 %v261
    %283 = vmatprep.subr.mxu0 0.0
    %284 = vmatpush1.msra.mxu0 %v260
    %285 = vmatprep.subr.mxu0 0.0
    %286 = vmatpush1.msra.mxu0 %v259
    %287 = vmatprep.subr.mxu0 0.0
    %288 = vmatpush1.msra.mxu0 %v258
    %289 = vmatprep.subr.mxu0 0.0
    %290 = vmatpush1.msra.mxu0 %v257
    %291 = vmatprep.subr.mxu0 0.0
    %292 = vmatpush1.msra.mxu0 %v256
    %293 = vmatprep.subr.mxu0 0.0
    %294 = vmatpush1.msra.mxu0 %v255
    %295 = vmatprep.subr.mxu0 0.0
    %296 = vmatpush1.msra.mxu0 %v254
    %297 = vmatprep.subr.mxu0 0.0
    %298 = vmatpush1.msra.mxu0 %v253
    %299 = vmatprep.subr.mxu0 0.0
    %300 = vmatpush1.msra.mxu0 %v252
    %301 = vmatprep.subr.mxu0 0.0
    %302 = vmatpush1.msra.mxu0 %v251
    %303 = vmatprep.subr.mxu0 0.0
    %304 = vmatpush1.msra.mxu0 %v250
    %305 = vmatprep.subr.mxu0 0.0
    %306 = vmatpush2.msra.mxu0 0.0
    %307 = vmatprep.subr.mxu0 0.0
    %308 = vmatpush2.msra.mxu0 0.0
    %309 = vmatprep.subr.mxu0 0.0
    %310 = vmatpush2.msra.mxu0 0.0
    %311 = vmatprep.subr.mxu0 0.0
    %312 = vmatpush2.msra.mxu0 0.0
    %313 = vmatprep.subr.mxu0 0.0
    %314 = vmatpush2.msra.mxu0 0.0
    %315 = vmatprep.subr.mxu0 0.0
    %316 = vmatpush2.msra.mxu0 0.0
    %317 = vmatprep.subr.mxu0 0.0
    %318 = vmatpush2.msra.mxu0 0.0
    %319 = vmatprep.subr.mxu0 0.0
    %320 = vmatpush2.msra.mxu0 0.0
    %321 = vmatprep.subr.mxu0 0.0
    %322 = vmatpush2.msra.mxu0 0.0
    %323 = vmatprep.subr.mxu0 0.0
    %324 = vmatpush2.msra.mxu0 0.0
    %325 = vmatprep.subr.mxu0 0.0
    %326 = vmatpush2.msra.mxu0 0.0
    %327 = vmatprep.subr.mxu0 0.0
    %328 = vmatpush2.msra.mxu0 0.0
    %329 = vmatprep.subr.mxu0 0.0
    %330 = vmatpush2.msra.mxu0 0.0
    %331 = vmatprep.subr.mxu0 0.0
    %332 = vmatpush2.msra.mxu0 0.0
    %333 = vmatprep.subr.mxu0 0.0
    %334 = vmatpush2.msra.mxu0 0.0
    %335 = vmatprep.subr.mxu0 0.0
    %336 = vmatpush2.msra.mxu0 0.0
    %337 = vmatprep.mubr.f32.mxu0 0.0
    %338 = vmatmul.mubr.f32.gmra.mxu0 %v249
    %v339 = vpop.f32.mrf.mxu0
    %v340 = vadd.f32 %v271, %v339
    %v341 = vpop.f32.mrf.mxu0
    %342 = vdwg.mxu0
    %343 = vst [vmem:[#allocation8] sm:$0xff] %v340
    // Predicated region
    $region38: #{tpu_custom_call.1} parent=1 // pred_check
      _
    $region39: #{tpu_custom_call.1} parent=1 // pred_check_branch
      %345 = sbr.rel (0) target = $region41
    $region40: #{tpu_custom_call.1} parent=1 // pred_region
      %s347 = ssub.s32 128, 128
      %348 = vsyncadd [#allocation4], %s347
      %s350 = sshll.u32 [#allocation8], 4
      %s351 = int_to_ptr.vmem [resolvable:$true] %s350
      %353 = dma.vmem_to_hbm [thread:$0]  %s351, 128, %s6, [#allocation4]
    $region41: #{tpu_custom_call.1} parent=1 // pred_fallthru
      _
    // Predicated region
    $region42: #{tpu_custom_call.1} parent=1 // pred_check
      _
    $region43: #{tpu_custom_call.1} parent=1 // pred_check_branch
      %355 = sbr.rel (0) target = $region45
    $region44: #{tpu_custom_call.1} parent=1 // pred_region
      %356 = dma.done [#allocation4], 128
    $region45: #{tpu_custom_call.1} parent=1 // pred_fallthru
      _
    %357 = vsyncpa [#allocation3], 1
    %358 = vsyncpa [#allocation6], 1
    %359 = vsyncpa [#allocation4], 1

</llo_original>
